<compile_context>
chip_gen: v6e
topology: v6e:2x2x1
jax: 0.10.0
libtpu: 0.0.40
codegen_flags: <defaults>
</compile_context>

<pallas_src>
import jax
import jax.numpy as jnp
from jax.experimental import pallas as pl
from jax.experimental.pallas import tpu as pltpu


def ensemble_weighted_kernel(img_ref, ts_ref, w1i_ref, w1t_ref,
                             b1_ref, w2_ref, b2_ref, out_ref):
    """One batch tile of the weighted ensemble (all sub-models fused).

    img_ref : [TB, C*HW]      f32   flattened-NCHW image tile
    ts_ref  : [TB, TS]        f32   flattened time-series tile
    w1i_ref : [C*HW, MH_PAD]  bf16  fused layer-1 image weights (mean-pool folded in)
    w1t_ref : [TS,   MH_PAD]  bf16  fused layer-1 time-series weights
    b1_ref  : [1, MH_PAD]     f32
    w2_ref  : [MH_PAD, 1]     f32   head weights, pre-scaled by softmax(model_weights)
    b2_ref  : [1, 1]          f32   softmax-weighted sum of head biases
    out_ref : [TB, 1]         f32   ensemble logits
    """
    # In-kernel downcast (VPU, hidden under the image DMA); MXU stays in bf16
    # with f32 accumulation.
    img = img_ref[...].astype(jnp.bfloat16)
    ts = ts_ref[...].astype(jnp.bfloat16)

    # Fused layer 1 for all M sub-models: two MXU pushes, f32 accumulation.
    h = (jnp.dot(img, w1i_ref[...], preferred_element_type=jnp.float32)
         + jnp.dot(ts, w1t_ref[...], preferred_element_type=jnp.float32)
         + b1_ref[...])                                    # [TB, MH_PAD]
    h = jnp.maximum(h, 0.0)                                # ReLU

    # Head matmul with softmax(model_weights) already folded into w2/b2:
    # the weighted ensemble combine is free.
    out_ref[...] = (jnp.dot(h, w2_ref[...], preferred_element_type=jnp.float32)
                    + b2_ref[...])                         # [TB, 1]


class EnsembleModelPallas:
    """Weighted-ensemble model with deterministic surrogate sub-models."""

    NUM_MODELS = 3  # cnn_lstm, tcn, transformer

    def __init__(self, input_channels=4, img_size=16, time_input_dim=8,
                 seq_len=8, hidden_dim=32, seed=42):
        self.C = input_channels
        self.HW = img_size * img_size
        self.TS = seq_len * time_input_dim
        self.H = hidden_dim
        M = self.NUM_MODELS
        self.MH = M * self.H
        self.MH_PAD = ((self.MH + 127) // 128) * 128       # lane-dense hidden width

        key = jax.random.PRNGKey(seed)
        k1, k2, k3, k4, k5 = jax.random.split(key, 5)
        scale = 0.1
        self.w1_img = scale * jax.random.normal(k1, (M, self.C, self.H), jnp.float32)
        self.w1_ts = scale * jax.random.normal(k2, (M, self.TS, self.H), jnp.float32)
        self.b1 = scale * jax.random.normal(k3, (M, 1, self.H), jnp.float32)
        self.w2 = scale * jax.random.normal(k4, (M, self.H, 1), jnp.float32)
        self.b2 = scale * jax.random.normal(k5, (M, 1, 1), jnp.float32)
        # nn.Parameter(torch.ones(num_models) / num_models)
        self.model_weights = jnp.ones((M,), jnp.float32) / M

        # ---- cached layer-1 fusion (independent of model_weights; built once) ----
        pad_cols = self.MH_PAD - self.MH
        # Image weights: [M, C, H] -> [C, M*H]; fold mean-pooling (1/HW) and
        # expand over HW so the image dot subsumes the spatial pooling
        # (exact algebraic rewrite: pooling and layer 1 are both linear).
        w1i = jnp.transpose(self.w1_img, (1, 0, 2)).reshape(self.C, self.MH)
        w1i_exp = jnp.broadcast_to(w1i[:, None, :] / self.HW,
                                   (self.C, self.HW, self.MH)
                                   ).reshape(self.C * self.HW, self.MH)
        self.w1i_fused = jnp.pad(w1i_exp, ((0, 0), (0, pad_cols))).astype(jnp.bfloat16)
        # Time-series weights: [M, TS, H] -> [TS, M*H]
        w1t = jnp.transpose(self.w1_ts, (1, 0, 2)).reshape(self.TS, self.MH)
        self.w1t_fused = jnp.pad(w1t, ((0, 0), (0, pad_cols))).astype(jnp.bfloat16)
        self.b1_fused = jnp.pad(self.b1.reshape(1, self.MH), ((0, 0), (0, pad_cols)))

    # ---- per-call head fusion (model_weights are learnable -> do per call) ----
    def _head_params(self):
        w_soft = jax.nn.softmax(self.model_weights)                  # [M]
        w2 = (self.w2 * w_soft[:, None, None]).reshape(self.MH, 1)   # [M*H, 1]
        w2 = jnp.pad(w2, ((0, self.MH_PAD - self.MH), (0, 0)))       # [MH_PAD, 1]
        b2 = jnp.sum(self.b2[:, 0, 0] * w_soft).reshape(1, 1)        # [1, 1]
        return w2, b2

    def __call__(self, images, time_series):
        """images: [B, C, H, W] (NCHW); time_series: [B, seq_len, time_input_dim]."""
        B = images.shape[0]
        CHW = self.C * self.HW

        # Layout-only reshapes; dtype stays f32 (bf16 cast happens in-kernel).
        img = images.reshape(B, CHW)
        ts = time_series.reshape(B, self.TS)
        w2, b2 = self._head_params()

        # Batch tiling:
        #  * large B: 2048-row pipelined blocks (f32 image tile 8 MiB, double-
        #    buffered 16 MiB; ~25 MiB total VMEM incl. intermediates).
        #  * 16 <= B <= 2048: split into >=2 blocks so both v7x TCs get work.
        #  * tiny B: single full-array block (shape == array dims, no (8,128)
        #    constraint).
        TB_TARGET = 2048
        if B > TB_TARGET:
            TB = TB_TARGET
        elif B >= 16:
            TB = ((-(-B // 2)) + 7) // 8 * 8
        else:
            TB = B
        num_blocks = pl.cdiv(B, TB)   # partial last block masked by Pallas; no jnp.pad

        out = pl.pallas_call(
            ensemble_weighted_kernel,
            out_shape=jax.ShapeDtypeStruct((B, 1), jnp.float32),
            grid_spec=pltpu.PrefetchScalarGridSpec(
                num_scalar_prefetch=0,
                grid=(num_blocks,),
                in_specs=[
                    pl.BlockSpec((TB, CHW), lambda i: (i, 0)),
                    pl.BlockSpec((TB, self.TS), lambda i: (i, 0)),
                    # Weights: constant index_map -> stay VMEM-resident, no re-DMA.
                    pl.BlockSpec((CHW, self.MH_PAD), lambda i: (0, 0)),
                    pl.BlockSpec((self.TS, self.MH_PAD), lambda i: (0, 0)),
                    pl.BlockSpec((1, self.MH_PAD), lambda i: (0, 0)),
                    pl.BlockSpec((self.MH_PAD, 1), lambda i: (0, 0)),
                    pl.BlockSpec((1, 1), lambda i: (0, 0)),
                ],
                out_specs=pl.BlockSpec((TB, 1), lambda i: (i, 0)),
            ),
            compiler_params=pltpu.CompilerParams(
                dimension_semantics=("parallel",),
                vmem_limit_bytes=48 * 1024 * 1024),
        )(img, ts, self.w1i_fused, self.w1t_fused, self.b1_fused, w2, b2)
        return out


def _reference_forward(model, images, time_series):
    """Pure-JAX f32 reference of the same surrogate ensemble math."""
    B = images.shape[0]
    pooled = jnp.mean(images.reshape(B, model.C, model.HW), axis=-1)   # [B, C]
    ts = time_series.reshape(B, model.TS)
    w = jax.nn.softmax(model.model_weights)
    out = jnp.zeros((B, 1), jnp.float32)
    for m in range(model.NUM_MODELS):
        h = pooled @ model.w1_img[m] + ts @ model.w1_ts[m] + model.b1[m]
        h = jnp.maximum(h, 0.0)
        out = out + w[m] * (h @ model.w2[m] + model.b2[m])
    return out


if __name__ == "__main__":
    B, C, IMG, T_DIM, SEQ = 2, 4, 16, 8, 8

    key = jax.random.PRNGKey(0)
    k_img, k_ts = jax.random.split(key)
    images = jax.random.normal(k_img, (B, C, IMG, IMG), jnp.float32)
    time_series = jax.random.normal(k_ts, (B, SEQ, T_DIM), jnp.float32)

    model = EnsembleModelPallas(input_channels=C, img_size=IMG,
                                time_input_dim=T_DIM, seq_len=SEQ,
                                hidden_dim=32, seed=42)
    out = jax.block_until_ready(model(images, time_series))
    assert out.shape == (B, 1) and out.dtype == jnp.float32

    ref = _reference_forward(model, images, time_series)
    assert jnp.allclose(out, ref, atol=3e-2, rtol=3e-2), (out, ref)

    print("KERNEL_OK")
</pallas_src>

<mosaic_0001>
module attributes {stable_mosaic.version = 11 : i64} {
  func.func @ensemble_weighted_kernel(%arg0: i32, %arg1: memref<2x1024xf32, #tpu.memory_space<vmem>>, %arg2: memref<2x64xf32, #tpu.memory_space<vmem>>, %arg3: memref<1024x128xbf16, #tpu.memory_space<vmem>>, %arg4: memref<64x128xbf16, #tpu.memory_space<vmem>>, %arg5: memref<1x128xf32, #tpu.memory_space<vmem>>, %arg6: memref<128x1xf32, #tpu.memory_space<vmem>>, %arg7: memref<1x1xf32, #tpu.memory_space<vmem>>, %arg8: memref<2x1xf32, #tpu.memory_space<vmem>>) attributes {dimension_semantics = [#tpu.dimension_semantics<parallel>], iteration_bounds = array<i64: 1>, scalar_prefetch = 0 : i64, scratch_operands = 0 : i64, tpu.core_type = #tpu.core_type<tc>, window_params = [{transform_indices = @transform_0, window_bounds = array<i64: 2, 1024>}, {transform_indices = @transform_1, window_bounds = array<i64: 2, 64>}, {pipeline_mode = #tpu.pipeline_mode<synchronous>, transform_indices = @transform_2, window_bounds = array<i64: 1024, 128>}, {pipeline_mode = #tpu.pipeline_mode<synchronous>, transform_indices = @transform_3, window_bounds = array<i64: 64, 128>}, {pipeline_mode = #tpu.pipeline_mode<synchronous>, transform_indices = @transform_4, window_bounds = array<i64: 1, 128>}, {pipeline_mode = #tpu.pipeline_mode<synchronous>, transform_indices = @transform_5, window_bounds = array<i64: 128, 1>}, {pipeline_mode = #tpu.pipeline_mode<synchronous>, transform_indices = @transform_6, window_bounds = array<i64: 1, 1>}, {transform_indices = @transform_7, window_bounds = array<i64: 2, 1>}]} {
    %c0 = arith.constant 0 : index
    %c0_0 = arith.constant 0 : index
    %0 = vector.load %arg1[%c0, %c0_0] : memref<2x1024xf32, #tpu.memory_space<vmem>>, vector<2x1024xf32>
    %1 = arith.truncf %0 : vector<2x1024xf32> to vector<2x1024xbf16>
    %c0_1 = arith.constant 0 : index
    %c0_2 = arith.constant 0 : index
    %2 = vector.load %arg2[%c0_1, %c0_2] : memref<2x64xf32, #tpu.memory_space<vmem>>, vector<2x64xf32>
    %3 = arith.truncf %2 : vector<2x64xf32> to vector<2x64xbf16>
    %c0_3 = arith.constant 0 : index
    %c0_4 = arith.constant 0 : index
    %4 = vector.load %arg3[%c0_3, %c0_4] : memref<1024x128xbf16, #tpu.memory_space<vmem>>, vector<1024x128xbf16>
    %cst = arith.constant dense<0.000000e+00> : vector<2x128xf32>
    %5 = tpu.matmul %1, %4, %cst {dimension_numbers = #tpu.dot_dimension_numbers<[1], [0], [0], [1], [0, 0, 1, 1], [], []>} : vector<2x1024xbf16>, vector<1024x128xbf16>, vector<2x128xf32> -> vector<2x128xf32>
    %c0_5 = arith.constant 0 : index
    %c0_6 = arith.constant 0 : index
    %6 = vector.load %arg4[%c0_5, %c0_6] : memref<64x128xbf16, #tpu.memory_space<vmem>>, vector<64x128xbf16>
    %cst_7 = arith.constant dense<0.000000e+00> : vector<2x128xf32>
    %7 = tpu.matmul %3, %6, %cst_7 {dimension_numbers = #tpu.dot_dimension_numbers<[1], [0], [0], [1], [0, 0, 1, 1], [], []>} : vector<2x64xbf16>, vector<64x128xbf16>, vector<2x128xf32> -> vector<2x128xf32>
    %8 = arith.addf %5, %7 : vector<2x128xf32>
    %c0_8 = arith.constant 0 : index
    %c0_9 = arith.constant 0 : index
    %9 = vector.load %arg5[%c0_8, %c0_9] : memref<1x128xf32, #tpu.memory_space<vmem>>, vector<1x128xf32>
    %10 = vector.broadcast %9 : vector<1x128xf32> to vector<2x128xf32>
    %11 = arith.addf %8, %10 : vector<2x128xf32>
    %cst_10 = arith.constant 0.000000e+00 : f32
    %12 = vector.broadcast %cst_10 : f32 to vector<2x128xf32>
    %13 = arith.maximumf %11, %12 : vector<2x128xf32>
    %c0_11 = arith.constant 0 : index
    %c0_12 = arith.constant 0 : index
    %14 = vector.load %arg6[%c0_11, %c0_12] : memref<128x1xf32, #tpu.memory_space<vmem>>, vector<128x1xf32>
    %cst_13 = arith.constant dense<0.000000e+00> : vector<2x1xf32>
    %15 = tpu.matmul %13, %14, %cst_13 {dimension_numbers = #tpu.dot_dimension_numbers<[1], [0], [0], [1], [0, 0, 1, 1], [], []>} : vector<2x128xf32>, vector<128x1xf32>, vector<2x1xf32> -> vector<2x1xf32>
    %c0_14 = arith.constant 0 : index
    %c0_15 = arith.constant 0 : index
    %16 = vector.load %arg7[%c0_14, %c0_15] : memref<1x1xf32, #tpu.memory_space<vmem>>, vector<1x1xf32>
    %17 = vector.broadcast %16 : vector<1x1xf32> to vector<2x1xf32>
    %18 = arith.addf %15, %17 : vector<2x1xf32>
    %c0_16 = arith.constant 0 : index
    %c0_17 = arith.constant 0 : index
    %19 = vector.load %arg8[%c0_16, %c0_17] : memref<2x1xf32, #tpu.memory_space<vmem>>, vector<2x1xf32>
    tpu.vector_store %arg8[%c0_16, %c0_17], %18 {strides = array<i32>} : memref<2x1xf32, #tpu.memory_space<vmem>>, vector<2x1xf32>,
    return
  }
  func.func @transform_0(%arg0: i32) -> (i32, i32) {
    %c0_i32 = arith.constant 0 : i32
    %c0_i32_0 = arith.constant 0 : i32
    return %arg0, %c0_i32 : i32, i32
  }
  func.func @transform_1(%arg0: i32) -> (i32, i32) {
    %c0_i32 = arith.constant 0 : i32
    %c0_i32_0 = arith.constant 0 : i32
    return %arg0, %c0_i32 : i32, i32
  }
  func.func @transform_2(%arg0: i32) -> (i32, i32) {
    %c0_i32 = arith.constant 0 : i32
    %c0_i32_0 = arith.constant 0 : i32
    %c0_i32_1 = arith.constant 0 : i32
    return %c0_i32, %c0_i32_0 : i32, i32
  }
  func.func @transform_3(%arg0: i32) -> (i32, i32) {
    %c0_i32 = arith.constant 0 : i32
    %c0_i32_0 = arith.constant 0 : i32
    %c0_i32_1 = arith.constant 0 : i32
    return %c0_i32, %c0_i32_0 : i32, i32
  }
  func.func @transform_4(%arg0: i32) -> (i32, i32) {
    %c0_i32 = arith.constant 0 : i32
    %c0_i32_0 = arith.constant 0 : i32
    %c0_i32_1 = arith.constant 0 : i32
    return %c0_i32, %c0_i32_0 : i32, i32
  }
  func.func @transform_5(%arg0: i32) -> (i32, i32) {
    %c0_i32 = arith.constant 0 : i32
    %c0_i32_0 = arith.constant 0 : i32
    %c0_i32_1 = arith.constant 0 : i32
    return %c0_i32, %c0_i32_0 : i32, i32
  }
  func.func @transform_6(%arg0: i32) -> (i32, i32) {
    %c0_i32 = arith.constant 0 : i32
    %c0_i32_0 = arith.constant 0 : i32
    %c0_i32_1 = arith.constant 0 : i32
    return %c0_i32, %c0_i32_0 : i32, i32
  }
  func.func @transform_7(%arg0: i32) -> (i32, i32) {
    %c0_i32 = arith.constant 0 : i32
    %c0_i32_0 = arith.constant 0 : i32
    return %arg0, %c0_i32 : i32, i32
  }
}

</mosaic_0001>

<llo_original>
// kernel: tpu_custom_call.1
$region0: #{tpu_custom_call.1}
  #allocation0 [shape = 'u32[]', space=smem, size = 0x4, offset = 0x4, fixed_abs, tag = 'smem constant byte address 0x4 - core index']
  #allocation1 [shape = 'u32[144,128]{1,0:T(1,128)}', space=vmem, size = 0x12000, scoped, tag = 'internal scratch']
  #allocation2 [shape = 'f32[1,1]{1,0:T(1,128)S(1)}', space=vmem, size = 0x200, scoped, tag = 'scoped memory for tpu_custom_call.1']
  %s0 = inlined_call_operand.vmem [shape: f32[2,1024], index: 0, kind: input, shape index: {}]
  %s1 = inlined_call_operand.vmem [shape: f32[2,64], index: 1, kind: input, shape index: {}]
  %s2 = inlined_call_operand.hbm [shape: bf16[1024,128], index: 2, kind: input, shape index: {}]
  %s3 = inlined_call_operand.vmem [shape: bf16[64,128], index: 3, kind: input, shape index: {}]
  %s4 = inlined_call_operand.vmem [shape: f32[1,128], index: 4, kind: input, shape index: {}]
  %s5 = inlined_call_operand.vmem [shape: f32[128,1], index: 5, kind: input, shape index: {}]
  %s6 = inlined_call_operand.<no memory space> [shape: f32[1,1], index: 6, kind: input, shape index: {}]
  %s7 = inlined_call_operand.vmem [shape: f32[2,1], index: 7, kind: output, shape index: {}]
  %s8 = sld [smem:[#allocation0]]
  $region42: #{tpu_custom_call.1} parent=0
    _
  %s10 = ssub.s32 1, %s8
  %s11 = scalar_select 0, %s10, %s8
  %v12 = vstv %s6
  %13 = vst [vmem:[#allocation2] sm:$0x1] %v12
  $region1: #{tpu_custom_call.1} parent=0
    #allocation3 [shape = 'u8[262144]{0}', space=vmem, size = 0x40000, scoped, tag = 'input window, operand 2, single buffered']
    #allocation4 [shape = 's32[1]{0}', space=sflag, size = 0x4, scoped, tag = 'scoped memory for tpu_custom_call.1']
    %14 = vsyncpa [#allocation4], 0
    // Predicated region
    $region2: #{tpu_custom_call.1} parent=1 // pred_check
      _
    $region3: #{tpu_custom_call.1} parent=1 // pred_check_branch
      %16 = sbr.rel (0) target = $region5
    $region4: #{tpu_custom_call.1} parent=1 // pred_region
      _
    $region5: #{tpu_custom_call.1} parent=1 // pred_fallthru
      _
    // Predicated region
    $region6: #{tpu_custom_call.1} parent=1 // pred_check
      _
    $region7: #{tpu_custom_call.1} parent=1 // pred_check_branch
      %18 = sbr.rel (0) target = $region9
    $region8: #{tpu_custom_call.1} parent=1 // pred_region
      _
    $region9: #{tpu_custom_call.1} parent=1 // pred_fallthru
      _
    // Predicated region
    $region10: #{tpu_custom_call.1} parent=1 // pred_check
      _
    $region11: #{tpu_custom_call.1} parent=1 // pred_check_branch
      %20 = sbr.rel (0) target = $region13
    $region12: #{tpu_custom_call.1} parent=1 // pred_region
      %s22 = ssub.s32 8192, 8192
      %23 = vsyncadd [#allocation4], %s22
      %s24 = sshll.u32 [#allocation3], 4
      %s25 = int_to_ptr.vmem [resolvable:$true] %s24
      %30 = dma.hbm_to_vmem [thread:$0]  %s2, 8192, %s25, [#allocation4], 64, 64, 4
    $region13: #{tpu_custom_call.1} parent=1 // pred_fallthru
      _
    // Predicated region
    $region14: #{tpu_custom_call.1} parent=1 // pred_check
      _
    $region15: #{tpu_custom_call.1} parent=1 // pred_check_branch
      %32 = sbr.rel (0) target = $region17
    $region16: #{tpu_custom_call.1} parent=1 // pred_region
      _
    $region17: #{tpu_custom_call.1} parent=1 // pred_fallthru
      _
    // Predicated region
    $region18: #{tpu_custom_call.1} parent=1 // pred_check
      _
    $region19: #{tpu_custom_call.1} parent=1 // pred_check_branch
      %34 = sbr.rel (0) target = $region21
    $region20: #{tpu_custom_call.1} parent=1 // pred_region
      _
    $region21: #{tpu_custom_call.1} parent=1 // pred_fallthru
      _
    // Predicated region
    $region22: #{tpu_custom_call.1} parent=1 // pred_check
      _
    $region23: #{tpu_custom_call.1} parent=1 // pred_check_branch
      %36 = sbr.rel (0) target = $region25
    $region24: #{tpu_custom_call.1} parent=1 // pred_region
      _
    $region25: #{tpu_custom_call.1} parent=1 // pred_fallthru
      _
    // Predicated region
    $region26: #{tpu_custom_call.1} parent=1 // pred_check
      _
    $region27: #{tpu_custom_call.1} parent=1 // pred_check_branch
      %38 = sbr.rel (0) target = $region29
    $region28: #{tpu_custom_call.1} parent=1 // pred_region
      _
    $region29: #{tpu_custom_call.1} parent=1 // pred_fallthru
      _
    // Predicated region
    $region30: #{tpu_custom_call.1} parent=1 // pred_check
      _
    $region31: #{tpu_custom_call.1} parent=1 // pred_check_branch
      %40 = sbr.rel (0) target = $region33
    $region32: #{tpu_custom_call.1} parent=1 // pred_region
      %41 = dma.done [#allocation4], 8192
    $region33: #{tpu_custom_call.1} parent=1 // pred_fallthru
      _
    %v43 = vld [vmem:[%s0] sm:$0xff]
    %v44 = vld [vmem:[%s0 + $0x8] sm:$0xff]
    %v47 = vcombine.high %v43, %v43
    %v49 = vunpack.c.l.s4 1983009808
    %v50 = vunpack.c.0.s8 %v49
    %v51 = vlaneseq
    %v52 = vshrl.u32 %v51, 7
    %v53 = vsub.s32 %v50, %v52
    %v54 = vrot.slane %v43, %v53
    %v56 = vunpack.c.l.s4 1983009808
    %v57 = vunpack.c.0.s8 %v56
    %v58 = vlaneseq
    %v59 = vshrl.u32 %v58, 7
    %v60 = vsub.s32 %v57, %v59
    %v61 = vrot.slane %v47, %v60
    %v62 = vcombine.high %v54, %v54
    %v63 = vcombine.high %v61, %v61
    %v64 = vcombine.high %v44, %v44
    %v66 = vunpack.c.l.s4 1983009808
    %v67 = vunpack.c.0.s8 %v66
    %v68 = vlaneseq
    %v69 = vshrl.u32 %v68, 7
    %v70 = vsub.s32 %v67, %v69
    %v71 = vrot.slane %v44, %v70
    %v73 = vunpack.c.l.s4 1983009808
    %v74 = vunpack.c.0.s8 %v73
    %v75 = vlaneseq
    %v76 = vshrl.u32 %v75, 7
    %v77 = vsub.s32 %v74, %v76
    %v78 = vrot.slane %v64, %v77
    %v79 = vcombine.high %v71, %v71
    %v80 = vcombine.high %v78, %v78
    %v89 = vpack.c.bf16 %v54, %v54
    %v90 = vpack.c.bf16 %v62, %v62
    %v91 = vpack.c.bf16 %v61, %v61
    %v92 = vpack.c.bf16 %v63, %v63
    %v93 = vpack.c.bf16 %v71, %v71
    %v94 = vpack.c.bf16 %v79, %v79
    %v95 = vpack.c.bf16 %v78, %v78
    %v96 = vpack.c.bf16 %v80, %v80
    %v97 = vld [vmem:[%s1] sm:$0x3]
    %v98 = vpack.c.bf16 %v97, %v97
    %v99 = vld [vmem:[#allocation3] sm:$0xf]
    %v100 = vld [vmem:[#allocation3 + $0x4] sm:$0xf]
    %v101 = vld [vmem:[#allocation3 + $0x8] sm:$0xf]
    %v102 = vld [vmem:[#allocation3 + $0xc] sm:$0xf]
    %v103 = vld [vmem:[#allocation3 + $0x10] sm:$0xf]
    %v104 = vld [vmem:[#allocation3 + $0x14] sm:$0xf]
    %v105 = vld [vmem:[#allocation3 + $0x18] sm:$0xf]
    %v106 = vld [vmem:[#allocation3 + $0x1c] sm:$0xf]
    %v107 = vld [vmem:[#allocation3 + $0x20] sm:$0xf]
    %v108 = vld [vmem:[#allocation3 + $0x24] sm:$0xf]
    %v109 = vld [vmem:[#allocation3 + $0x28] sm:$0xf]
    %v110 = vld [vmem:[#allocation3 + $0x2c] sm:$0xf]
    %v111 = vld [vmem:[#allocation3 + $0x30] sm:$0xf]
    %v112 = vld [vmem:[#allocation3 + $0x34] sm:$0xf]
    %v113 = vld [vmem:[#allocation3 + $0x38] sm:$0xf]
    %v114 = vld [vmem:[#allocation3 + $0x3c] sm:$0xf]
    %v115 = vld [vmem:[#allocation3 + $0x40] sm:$0xf]
    %v116 = vld [vmem:[#allocation3 + $0x44] sm:$0xf]
    %v117 = vld [vmem:[#allocation3 + $0x48] sm:$0xf]
    %v118 = vld [vmem:[#allocation3 + $0x4c] sm:$0xf]
    %v119 = vld [vmem:[#allocation3 + $0x50] sm:$0xf]
    %v120 = vld [vmem:[#allocation3 + $0x54] sm:$0xf]
    %v121 = vld [vmem:[#allocation3 + $0x58] sm:$0xf]
    %v122 = vld [vmem:[#allocation3 + $0x5c] sm:$0xf]
    %v123 = vld [vmem:[#allocation3 + $0x60] sm:$0xf]
    %v124 = vld [vmem:[#allocation3 + $0x64] sm:$0xf]
    %v125 = vld [vmem:[#allocation3 + $0x68] sm:$0xf]
    %v126 = vld [vmem:[#allocation3 + $0x6c] sm:$0xf]
    %v127 = vld [vmem:[#allocation3 + $0x70] sm:$0xf]
    %v128 = vld [vmem:[#allocation3 + $0x74] sm:$0xf]
    %v129 = vld [vmem:[#allocation3 + $0x78] sm:$0xf]
    %v130 = vld [vmem:[#allocation3 + $0x7c] sm:$0xf]
    %v131 = vld [vmem:[#allocation3 + $0x80] sm:$0xf]
    %v132 = vld [vmem:[#allocation3 + $0x84] sm:$0xf]
    %v133 = vld [vmem:[#allocation3 + $0x88] sm:$0xf]
    %v134 = vld [vmem:[#allocation3 + $0x8c] sm:$0xf]
    %v135 = vld [vmem:[#allocation3 + $0x90] sm:$0xf]
    %v136 = vld [vmem:[#allocation3 + $0x94] sm:$0xf]
    %v137 = vld [vmem:[#allocation3 + $0x98] sm:$0xf]
    %v138 = vld [vmem:[#allocation3 + $0x9c] sm:$0xf]
    %v139 = vld [vmem:[#allocation3 + $0xa0] sm:$0xf]
    %v140 = vld [vmem:[#allocation3 + $0xa4] sm:$0xf]
    %v141 = vld [vmem:[#allocation3 + $0xa8] sm:$0xf]
    %v142 = vld [vmem:[#allocation3 + $0xac] sm:$0xf]
    %v143 = vld [vmem:[#allocation3 + $0xb0] sm:$0xf]
    %v144 = vld [vmem:[#allocation3 + $0xb4] sm:$0xf]
    %v145 = vld [vmem:[#allocation3 + $0xb8] sm:$0xf]
    %v146 = vld [vmem:[#allocation3 + $0xbc] sm:$0xf]
    %v147 = vld [vmem:[#allocation3 + $0xc0] sm:$0xf]
    %v148 = vld [vmem:[#allocation3 + $0xc4] sm:$0xf]
    %v149 = vld [vmem:[#allocation3 + $0xc8] sm:$0xf]
    %v150 = vld [vmem:[#allocation3 + $0xcc] sm:$0xf]
    %v151 = vld [vmem:[#allocation3 + $0xd0] sm:$0xf]
    %v152 = vld [vmem:[#allocation3 + $0xd4] sm:$0xf]
    %v153 = vld [vmem:[#allocation3 + $0xd8] sm:$0xf]
    %v154 = vld [vmem:[#allocation3 + $0xdc] sm:$0xf]
    %v155 = vld [vmem:[#allocation3 + $0xe0] sm:$0xf]
    %v156 = vld [vmem:[#allocation3 + $0xe4] sm:$0xf]
    %v157 = vld [vmem:[#allocation3 + $0xe8] sm:$0xf]
    %v158 = vld [vmem:[#allocation3 + $0xec] sm:$0xf]
    %v159 = vld [vmem:[#allocation3 + $0xf0] sm:$0xf]
    %v160 = vld [vmem:[#allocation3 + $0xf4] sm:$0xf]
    %v161 = vld [vmem:[#allocation3 + $0xf8] sm:$0xf]
    %v162 = vld [vmem:[#allocation3 + $0xfc] sm:$0xf]
    %v163 = vld [vmem:[#allocation3 + $0x100] sm:$0xf]
    %v164 = vld [vmem:[#allocation3 + $0x104] sm:$0xf]
    %v165 = vld [vmem:[#allocation3 + $0x108] sm:$0xf]
    %v166 = vld [vmem:[#allocation3 + $0x10c] sm:$0xf]
    %v167 = vld [vmem:[#allocation3 + $0x110] sm:$0xf]
    %v168 = vld [vmem:[#allocation3 + $0x114] sm:$0xf]
    %v169 = vld [vmem:[#allocation3 + $0x118] sm:$0xf]
    %v170 = vld [vmem:[#allocation3 + $0x11c] sm:$0xf]
    %v171 = vld [vmem:[#allocation3 + $0x120] sm:$0xf]
    %v172 = vld [vmem:[#allocation3 + $0x124] sm:$0xf]
    %v173 = vld [vmem:[#allocation3 + $0x128] sm:$0xf]
    %v174 = vld [vmem:[#allocation3 + $0x12c] sm:$0xf]
    %v175 = vld [vmem:[#allocation3 + $0x130] sm:$0xf]
    %v176 = vld [vmem:[#allocation3 + $0x134] sm:$0xf]
    %v177 = vld [vmem:[#allocation3 + $0x138] sm:$0xf]
    %v178 = vld [vmem:[#allocation3 + $0x13c] sm:$0xf]
    %v179 = vld [vmem:[#allocation3 + $0x140] sm:$0xf]
    %v180 = vld [vmem:[#allocation3 + $0x144] sm:$0xf]
    %v181 = vld [vmem:[#allocation3 + $0x148] sm:$0xf]
    %v182 = vld [vmem:[#allocation3 + $0x14c] sm:$0xf]
    %v183 = vld [vmem:[#allocation3 + $0x150] sm:$0xf]
    %v184 = vld [vmem:[#allocation3 + $0x154] sm:$0xf]
    %v185 = vld [vmem:[#allocation3 + $0x158] sm:$0xf]
    %v186 = vld [vmem:[#allocation3 + $0x15c] sm:$0xf]
    %v187 = vld [vmem:[#allocation3 + $0x160] sm:$0xf]
    %v188 = vld [vmem:[#allocation3 + $0x164] sm:$0xf]
    %v189 = vld [vmem:[#allocation3 + $0x168] sm:$0xf]
    %v190 = vld [vmem:[#allocation3 + $0x16c] sm:$0xf]
    %v191 = vld [vmem:[#allocation3 + $0x170] sm:$0xf]
    %v192 = vld [vmem:[#allocation3 + $0x174] sm:$0xf]
    %v193 = vld [vmem:[#allocation3 + $0x178] sm:$0xf]
    %v194 = vld [vmem:[#allocation3 + $0x17c] sm:$0xf]
    %v195 = vld [vmem:[#allocation3 + $0x180] sm:$0xf]
    %v196 = vld [vmem:[#allocation3 + $0x184] sm:$0xf]
    %v197 = vld [vmem:[#allocation3 + $0x188] sm:$0xf]
    %v198 = vld [vmem:[#allocation3 + $0x18c] sm:$0xf]
    %v199 = vld [vmem:[#allocation3 + $0x190] sm:$0xf]
    %v200 = vld [vmem:[#allocation3 + $0x194] sm:$0xf]
    %v201 = vld [vmem:[#allocation3 + $0x198] sm:$0xf]
    %v202 = vld [vmem:[#allocation3 + $0x19c] sm:$0xf]
    %v203 = vld [vmem:[#allocation3 + $0x1a0] sm:$0xf]
    %v204 = vld [vmem:[#allocation3 + $0x1a4] sm:$0xf]
    %v205 = vld [vmem:[#allocation3 + $0x1a8] sm:$0xf]
    %v206 = vld [vmem:[#allocation3 + $0x1ac] sm:$0xf]
    %v207 = vld [vmem:[#allocation3 + $0x1b0] sm:$0xf]
    %v208 = vld [vmem:[#allocation3 + $0x1b4] sm:$0xf]
    %v209 = vld [vmem:[#allocation3 + $0x1b8] sm:$0xf]
    %v210 = vld [vmem:[#allocation3 + $0x1bc] sm:$0xf]
    %v211 = vld [vmem:[#allocation3 + $0x1c0] sm:$0xf]
    %v212 = vld [vmem:[#allocation3 + $0x1c4] sm:$0xf]
    %v213 = vld [vmem:[#allocation3 + $0x1c8] sm:$0xf]
    %v214 = vld [vmem:[#allocation3 + $0x1cc] sm:$0xf]
    %v215 = vld [vmem:[#allocation3 + $0x1d0] sm:$0xf]
    %v216 = vld [vmem:[#allocation3 + $0x1d4] sm:$0xf]
    %v217 = vld [vmem:[#allocation3 + $0x1d8] sm:$0xf]
    %v218 = vld [vmem:[#allocation3 + $0x1dc] sm:$0xf]
    %v219 = vld [vmem:[#allocation3 + $0x1e0] sm:$0xf]
    %v220 = vld [vmem:[#allocation3 + $0x1e4] sm:$0xf]
    %v221 = vld [vmem:[#allocation3 + $0x1e8] sm:$0xf]
    %v222 = vld [vmem:[#allocation3 + $0x1ec] sm:$0xf]
    %v223 = vld [vmem:[#allocation3 + $0x1f0] sm:$0xf]
    %v224 = vld [vmem:[#allocation3 + $0x1f4] sm:$0xf]
    %v225 = vld [vmem:[#allocation3 + $0x1f8] sm:$0xf]
    %v226 = vld [vmem:[#allocation3 + $0x1fc] sm:$0xf]
    %v227 = vld [vmem:[%s3] sm:$0xf]
    %v228 = vld [vmem:[%s3 + $0x4] sm:$0xf]
    %v229 = vld [vmem:[%s3 + $0x8] sm:$0xf]
    %v230 = vld [vmem:[%s3 + $0xc] sm:$0xf]
    %v231 = vld [vmem:[%s3 + $0x10] sm:$0xf]
    %v232 = vld [vmem:[%s3 + $0x14] sm:$0xf]
    %v233 = vld [vmem:[%s3 + $0x18] sm:$0xf]
    %v234 = vld [vmem:[%s3 + $0x1c] sm:$0xf]
    %v243 = vunpack.c.l.b16 %v227
    %v244 = vunpack.c.l.b16 %v228
    %v245 = vunpack.c.l.b16 %v229
    %v246 = vunpack.c.l.b16 %v230
    %v247 = vunpack.c.l.b16 %v231
    %v248 = vunpack.c.l.b16 %v232
    %v249 = vunpack.c.l.b16 %v233
    %v250 = vunpack.c.l.b16 %v234
    %v251 = vpack.c.b16 %v244, %v243
    %v252 = vpack.c.b16 %v246, %v245
    %v253 = vpack.c.b16 %v248, %v247
    %v254 = vpack.c.b16 %v250, %v249
    %vm259 = vcmask 523264
    %v261 = vsel %vm259, %v98, 0
    %263 = vmatprep.subr.bf16.mxu0 0
    %264 = vmatpush1.bf16.msra.mxu0 0
    %265 = vmatprep.subr.bf16.mxu0 0
    %266 = vmatpush1.bf16.msra.mxu0 0
    %267 = vmatprep.subr.bf16.mxu0 0
    %268 = vmatpush1.bf16.msra.mxu0 0
    %269 = vmatprep.subr.bf16.mxu0 0
    %270 = vmatpush1.bf16.msra.mxu0 0
    %271 = vmatprep.subr.bf16.mxu0 0
    %272 = vmatpush1.bf16.msra.mxu0 %v254
    %273 = vmatprep.subr.bf16.mxu0 0
    %274 = vmatpush1.bf16.msra.mxu0 %v253
    %275 = vmatprep.subr.bf16.mxu0 0
    %276 = vmatpush1.bf16.msra.mxu0 %v252
    %277 = vmatprep.subr.bf16.mxu0 0
    %278 = vmatpush1.bf16.msra.mxu0 %v251
    %279 = vmatprep.subr.bf16.mxu0 0
    %280 = vmatpush2.bf16.msra.mxu0 0
    %281 = vmatprep.subr.bf16.mxu0 0
    %282 = vmatpush2.bf16.msra.mxu0 0
    %283 = vmatprep.subr.bf16.mxu0 0
    %284 = vmatpush2.bf16.msra.mxu0 0
    %285 = vmatprep.subr.bf16.mxu0 0
    %286 = vmatpush2.bf16.msra.mxu0 0
    %287 = vmatprep.subr.bf16.mxu0 0
    %288 = vmatpush2.bf16.msra.mxu0 0
    %289 = vmatprep.subr.bf16.mxu0 0
    %290 = vmatpush2.bf16.msra.mxu0 0
    %291 = vmatprep.subr.bf16.mxu0 0
    %292 = vmatpush2.bf16.msra.mxu0 0
    %293 = vmatprep.subr.bf16.mxu0 0
    %294 = vmatpush2.bf16.msra.mxu0 0
    %295 = vmatprep.mubr.bf16.mxu0 0
    %296 = vmatmul.mubr.bf16.gmra.mxu0 %v261
    %v297 = vpop.f32.mrf.mxu0
    %v298 = vadd.f32 0.0, %v297
    %v299 = vpop.f32.mrf.mxu0
    %v300 = vpop.f32.mrf.mxu0
    %v301 = vpop.f32.mrf.mxu0
    %302 = vdwg.mxu0
    %v431 = vunpack.c.l.b16 %v99
    %v432 = vunpack.c.l.b16 %v100
    %v433 = vunpack.c.l.b16 %v101
    %v434 = vunpack.c.l.b16 %v102
    %v435 = vunpack.c.l.b16 %v103
    %v436 = vunpack.c.l.b16 %v104
    %v437 = vunpack.c.l.b16 %v105
    %v438 = vunpack.c.l.b16 %v106
    %v439 = vunpack.c.l.b16 %v107
    %v440 = vunpack.c.l.b16 %v108
    %v441 = vunpack.c.l.b16 %v109
    %v442 = vunpack.c.l.b16 %v110
    %v443 = vunpack.c.l.b16 %v111
    %v444 = vunpack.c.l.b16 %v112
    %v445 = vunpack.c.l.b16 %v113
    %v446 = vunpack.c.l.b16 %v114
    %v447 = vunpack.c.l.b16 %v115
    %v448 = vunpack.c.l.b16 %v116
    %v449 = vunpack.c.l.b16 %v117
    %v450 = vunpack.c.l.b16 %v118
    %v451 = vunpack.c.l.b16 %v119
    %v452 = vunpack.c.l.b16 %v120
    %v453 = vunpack.c.l.b16 %v121
    %v454 = vunpack.c.l.b16 %v122
    %v455 = vunpack.c.l.b16 %v123
    %v456 = vunpack.c.l.b16 %v124
    %v457 = vunpack.c.l.b16 %v125
    %v458 = vunpack.c.l.b16 %v126
    %v459 = vunpack.c.l.b16 %v127
    %v460 = vunpack.c.l.b16 %v128
    %v461 = vunpack.c.l.b16 %v129
    %v462 = vunpack.c.l.b16 %v130
    %v463 = vunpack.c.l.b16 %v131
    %v464 = vunpack.c.l.b16 %v132
    %v465 = vunpack.c.l.b16 %v133
    %v466 = vunpack.c.l.b16 %v134
    %v467 = vunpack.c.l.b16 %v135
    %v468 = vunpack.c.l.b16 %v136
    %v469 = vunpack.c.l.b16 %v137
    %v470 = vunpack.c.l.b16 %v138
    %v471 = vunpack.c.l.b16 %v139
    %v472 = vunpack.c.l.b16 %v140
    %v473 = vunpack.c.l.b16 %v141
    %v474 = vunpack.c.l.b16 %v142
    %v475 = vunpack.c.l.b16 %v143
    %v476 = vunpack.c.l.b16 %v144
    %v477 = vunpack.c.l.b16 %v145
    %v478 = vunpack.c.l.b16 %v146
    %v479 = vunpack.c.l.b16 %v147
    %v480 = vunpack.c.l.b16 %v148
    %v481 = vunpack.c.l.b16 %v149
    %v482 = vunpack.c.l.b16 %v150
    %v483 = vunpack.c.l.b16 %v151
    %v484 = vunpack.c.l.b16 %v152
    %v485 = vunpack.c.l.b16 %v153
    %v486 = vunpack.c.l.b16 %v154
    %v487 = vunpack.c.l.b16 %v155
    %v488 = vunpack.c.l.b16 %v156
    %v489 = vunpack.c.l.b16 %v157
    %v490 = vunpack.c.l.b16 %v158
    %v491 = vunpack.c.l.b16 %v159
    %v492 = vunpack.c.l.b16 %v160
    %v493 = vunpack.c.l.b16 %v161
    %v494 = vunpack.c.l.b16 %v162
    %v495 = vunpack.c.l.b16 %v163
    %v496 = vunpack.c.l.b16 %v164
    %v497 = vunpack.c.l.b16 %v165
    %v498 = vunpack.c.l.b16 %v166
    %v499 = vunpack.c.l.b16 %v167
    %v500 = vunpack.c.l.b16 %v168
    %v501 = vunpack.c.l.b16 %v169
    %v502 = vunpack.c.l.b16 %v170
    %v503 = vunpack.c.l.b16 %v171
    %v504 = vunpack.c.l.b16 %v172
    %v505 = vunpack.c.l.b16 %v173
    %v506 = vunpack.c.l.b16 %v174
    %v507 = vunpack.c.l.b16 %v175
    %v508 = vunpack.c.l.b16 %v176
    %v509 = vunpack.c.l.b16 %v177
    %v510 = vunpack.c.l.b16 %v178
    %v511 = vunpack.c.l.b16 %v179
    %v512 = vunpack.c.l.b16 %v180
    %v513 = vunpack.c.l.b16 %v181
    %v514 = vunpack.c.l.b16 %v182
    %v515 = vunpack.c.l.b16 %v183
    %v516 = vunpack.c.l.b16 %v184
    %v517 = vunpack.c.l.b16 %v185
    %v518 = vunpack.c.l.b16 %v186
    %v519 = vunpack.c.l.b16 %v187
    %v520 = vunpack.c.l.b16 %v188
    %v521 = vunpack.c.l.b16 %v189
    %v522 = vunpack.c.l.b16 %v190
    %v523 = vunpack.c.l.b16 %v191
    %v524 = vunpack.c.l.b16 %v192
    %v525 = vunpack.c.l.b16 %v193
    %v526 = vunpack.c.l.b16 %v194
    %v527 = vunpack.c.l.b16 %v195
    %v528 = vunpack.c.l.b16 %v196
    %v529 = vunpack.c.l.b16 %v197
    %v530 = vunpack.c.l.b16 %v198
    %v531 = vunpack.c.l.b16 %v199
    %v532 = vunpack.c.l.b16 %v200
    %v533 = vunpack.c.l.b16 %v201
    %v534 = vunpack.c.l.b16 %v202
    %v535 = vunpack.c.l.b16 %v203
    %v536 = vunpack.c.l.b16 %v204
    %v537 = vunpack.c.l.b16 %v205
    %v538 = vunpack.c.l.b16 %v206
    %v539 = vunpack.c.l.b16 %v207
    %v540 = vunpack.c.l.b16 %v208
    %v541 = vunpack.c.l.b16 %v209
    %v542 = vunpack.c.l.b16 %v210
    %v543 = vunpack.c.l.b16 %v211
    %v544 = vunpack.c.l.b16 %v212
    %v545 = vunpack.c.l.b16 %v213
    %v546 = vunpack.c.l.b16 %v214
    %v547 = vunpack.c.l.b16 %v215
    %v548 = vunpack.c.l.b16 %v216
    %v549 = vunpack.c.l.b16 %v217
    %v550 = vunpack.c.l.b16 %v218
    %v551 = vunpack.c.l.b16 %v219
    %v552 = vunpack.c.l.b16 %v220
    %v553 = vunpack.c.l.b16 %v221
    %v554 = vunpack.c.l.b16 %v222
    %v555 = vunpack.c.l.b16 %v223
    %v556 = vunpack.c.l.b16 %v224
    %v557 = vunpack.c.l.b16 %v225
    %v558 = vunpack.c.l.b16 %v226
    %v559 = vpack.c.b16 %v432, %v431
    %v560 = vpack.c.b16 %v434, %v433
    %v561 = vpack.c.b16 %v436, %v435
    %v562 = vpack.c.b16 %v438, %v437
    %v563 = vpack.c.b16 %v440, %v439
    %v564 = vpack.c.b16 %v442, %v441
    %v565 = vpack.c.b16 %v444, %v443
    %v566 = vpack.c.b16 %v446, %v445
    %v567 = vpack.c.b16 %v448, %v447
    %v568 = vpack.c.b16 %v450, %v449
    %v569 = vpack.c.b16 %v452, %v451
    %v570 = vpack.c.b16 %v454, %v453
    %v571 = vpack.c.b16 %v456, %v455
    %v572 = vpack.c.b16 %v458, %v457
    %v573 = vpack.c.b16 %v460, %v459
    %v574 = vpack.c.b16 %v462, %v461
    %v575 = vpack.c.b16 %v464, %v463
    %v576 = vpack.c.b16 %v466, %v465
    %v577 = vpack.c.b16 %v468, %v467
    %v578 = vpack.c.b16 %v470, %v469
    %v579 = vpack.c.b16 %v472, %v471
    %v580 = vpack.c.b16 %v474, %v473
    %v581 = vpack.c.b16 %v476, %v475
    %v582 = vpack.c.b16 %v478, %v477
    %v583 = vpack.c.b16 %v480, %v479
    %v584 = vpack.c.b16 %v482, %v481
    %v585 = vpack.c.b16 %v484, %v483
    %v586 = vpack.c.b16 %v486, %v485
    %v587 = vpack.c.b16 %v488, %v487
    %v588 = vpack.c.b16 %v490, %v489
    %v589 = vpack.c.b16 %v492, %v491
    %v590 = vpack.c.b16 %v494, %v493
    %v591 = vpack.c.b16 %v496, %v495
    %v592 = vpack.c.b16 %v498, %v497
    %v593 = vpack.c.b16 %v500, %v499
    %v594 = vpack.c.b16 %v502, %v501
    %v595 = vpack.c.b16 %v504, %v503
    %v596 = vpack.c.b16 %v506, %v505
    %v597 = vpack.c.b16 %v508, %v507
    %v598 = vpack.c.b16 %v510, %v509
    %v599 = vpack.c.b16 %v512, %v511
    %v600 = vpack.c.b16 %v514, %v513
    %v601 = vpack.c.b16 %v516, %v515
    %v602 = vpack.c.b16 %v518, %v517
    %v603 = vpack.c.b16 %v520, %v519
    %v604 = vpack.c.b16 %v522, %v521
    %v605 = vpack.c.b16 %v524, %v523
    %v606 = vpack.c.b16 %v526, %v525
    %v607 = vpack.c.b16 %v528, %v527
    %v608 = vpack.c.b16 %v530, %v529
    %v609 = vpack.c.b16 %v532, %v531
    %v610 = vpack.c.b16 %v534, %v533
    %v611 = vpack.c.b16 %v536, %v535
    %v612 = vpack.c.b16 %v538, %v537
    %v613 = vpack.c.b16 %v540, %v539
    %v614 = vpack.c.b16 %v542, %v541
    %v615 = vpack.c.b16 %v544, %v543
    %v616 = vpack.c.b16 %v546, %v545
    %v617 = vpack.c.b16 %v548, %v547
    %v618 = vpack.c.b16 %v550, %v549
    %v619 = vpack.c.b16 %v552, %v551
    %v620 = vpack.c.b16 %v554, %v553
    %v621 = vpack.c.b16 %v556, %v555
    %v622 = vpack.c.b16 %v558, %v557
    %687 = vmatprep.subr.bf16.mxu0 0
    %688 = vmatpush1.bf16.msra.mxu0 %v566
    %689 = vmatprep.subr.bf16.mxu0 0
    %690 = vmatpush1.bf16.msra.mxu0 %v565
    %691 = vmatprep.subr.bf16.mxu0 0
    %692 = vmatpush1.bf16.msra.mxu0 %v564
    %693 = vmatprep.subr.bf16.mxu0 0
    %694 = vmatpush1.bf16.msra.mxu0 %v563
    %695 = vmatprep.subr.bf16.mxu0 0
    %696 = vmatpush1.bf16.msra.mxu0 %v562
    %697 = vmatprep.subr.bf16.mxu0 0
    %698 = vmatpush1.bf16.msra.mxu0 %v561
    %699 = vmatprep.subr.bf16.mxu0 0
    %700 = vmatpush1.bf16.msra.mxu0 %v560
    %701 = vmatprep.subr.bf16.mxu0 0
    %702 = vmatpush1.bf16.msra.mxu0 %v559
    %703 = vmatprep.subr.bf16.mxu0 0
    %704 = vmatpush2.bf16.msra.mxu0 %v574
    %705 = vmatprep.subr.bf16.mxu0 0
    %706 = vmatpush2.bf16.msra.mxu0 %v573
    %707 = vmatprep.subr.bf16.mxu0 0
    %708 = vmatpush2.bf16.msra.mxu0 %v572
    %709 = vmatprep.subr.bf16.mxu0 0
    %710 = vmatpush2.bf16.msra.mxu0 %v571
    %711 = vmatprep.subr.bf16.mxu0 0
    %712 = vmatpush2.bf16.msra.mxu0 %v570
    %713 = vmatprep.subr.bf16.mxu0 0
    %714 = vmatpush2.bf16.msra.mxu0 %v569
    %715 = vmatprep.subr.bf16.mxu0 0
    %716 = vmatpush2.bf16.msra.mxu0 %v568
    %717 = vmatprep.subr.bf16.mxu0 0
    %718 = vmatpush2.bf16.msra.mxu0 %v567
    %719 = vmatprep.mubr.bf16.mxu0 %v90
    %720 = vmatmul.mubr.bf16.gmra.mxu0 %v89
    %v721 = vpop.f32.mrf.mxu0
    %v722 = vadd.f32 %v298, %v721
    %v723 = vpop.f32.mrf.mxu0
    %v724 = vpop.f32.mrf.mxu0
    %v725 = vpop.f32.mrf.mxu0
    %726 = vdwg.mxu0
    %727 = vmatprep.subr.bf16.mxu0 0
    %728 = vmatpush1.bf16.msra.mxu0 %v582
    %729 = vmatprep.subr.bf16.mxu0 0
    %730 = vmatpush1.bf16.msra.mxu0 %v581
    %731 = vmatprep.subr.bf16.mxu0 0
    %732 = vmatpush1.bf16.msra.mxu0 %v580
    %733 = vmatprep.subr.bf16.mxu0 0
    %734 = vmatpush1.bf16.msra.mxu0 %v579
    %735 = vmatprep.subr.bf16.mxu0 0
    %736 = vmatpush1.bf16.msra.mxu0 %v578
    %737 = vmatprep.subr.bf16.mxu0 0
    %738 = vmatpush1.bf16.msra.mxu0 %v577
    %739 = vmatprep.subr.bf16.mxu0 0
    %740 = vmatpush1.bf16.msra.mxu0 %v576
    %741 = vmatprep.subr.bf16.mxu0 0
    %742 = vmatpush1.bf16.msra.mxu0 %v575
    %743 = vmatprep.subr.bf16.mxu0 0
    %744 = vmatpush2.bf16.msra.mxu0 %v590
    %745 = vmatprep.subr.bf16.mxu0 0
    %746 = vmatpush2.bf16.msra.mxu0 %v589
    %747 = vmatprep.subr.bf16.mxu0 0
    %748 = vmatpush2.bf16.msra.mxu0 %v588
    %749 = vmatprep.subr.bf16.mxu0 0
    %750 = vmatpush2.bf16.msra.mxu0 %v587
    %751 = vmatprep.subr.bf16.mxu0 0
    %752 = vmatpush2.bf16.msra.mxu0 %v586
    %753 = vmatprep.subr.bf16.mxu0 0
    %754 = vmatpush2.bf16.msra.mxu0 %v585
    %755 = vmatprep.subr.bf16.mxu0 0
    %756 = vmatpush2.bf16.msra.mxu0 %v584
    %757 = vmatprep.subr.bf16.mxu0 0
    %758 = vmatpush2.bf16.msra.mxu0 %v583
    %759 = vmatprep.mubr.bf16.mxu0 %v92
    %760 = vmatmul.mubr.bf16.gmra.mxu0 %v91
    %v761 = vpop.f32.mrf.mxu0
    %v762 = vadd.f32 %v722, %v761
    %v763 = vpop.f32.mrf.mxu0
    %v764 = vpop.f32.mrf.mxu0
    %v765 = vpop.f32.mrf.mxu0
    %766 = vdwg.mxu0
    %767 = vmatprep.subr.bf16.mxu0 0
    %768 = vmatpush1.bf16.msra.mxu0 %v598
    %769 = vmatprep.subr.bf16.mxu0 0
    %770 = vmatpush1.bf16.msra.mxu0 %v597
    %771 = vmatprep.subr.bf16.mxu0 0
    %772 = vmatpush1.bf16.msra.mxu0 %v596
    %773 = vmatprep.subr.bf16.mxu0 0
    %774 = vmatpush1.bf16.msra.mxu0 %v595
    %775 = vmatprep.subr.bf16.mxu0 0
    %776 = vmatpush1.bf16.msra.mxu0 %v594
    %777 = vmatprep.subr.bf16.mxu0 0
    %778 = vmatpush1.bf16.msra.mxu0 %v593
    %779 = vmatprep.subr.bf16.mxu0 0
    %780 = vmatpush1.bf16.msra.mxu0 %v592
    %781 = vmatprep.subr.bf16.mxu0 0
    %782 = vmatpush1.bf16.msra.mxu0 %v591
    %783 = vmatprep.subr.bf16.mxu0 0
    %784 = vmatpush2.bf16.msra.mxu0 %v606
    %785 = vmatprep.subr.bf16.mxu0 0
    %786 = vmatpush2.bf16.msra.mxu0 %v605
    %787 = vmatprep.subr.bf16.mxu0 0
    %788 = vmatpush2.bf16.msra.mxu0 %v604
    %789 = vmatprep.subr.bf16.mxu0 0
    %790 = vmatpush2.bf16.msra.mxu0 %v603
    %791 = vmatprep.subr.bf16.mxu0 0
    %792 = vmatpush2.bf16.msra.mxu0 %v602
    %793 = vmatprep.subr.bf16.mxu0 0
    %794 = vmatpush2.bf16.msra.mxu0 %v601
    %795 = vmatprep.subr.bf16.mxu0 0
    %796 = vmatpush2.bf16.msra.mxu0 %v600
    %797 = vmatprep.subr.bf16.mxu0 0
    %798 = vmatpush2.bf16.msra.mxu0 %v599
    %799 = vmatprep.mubr.bf16.mxu0 %v94
    %800 = vmatmul.mubr.bf16.gmra.mxu0 %v93
    %v801 = vpop.f32.mrf.mxu0
    %v802 = vadd.f32 %v762, %v801
    %v803 = vpop.f32.mrf.mxu0
    %v804 = vpop.f32.mrf.mxu0
    %v805 = vpop.f32.mrf.mxu0
    %806 = vdwg.mxu0
    %807 = vmatprep.subr.bf16.mxu0 0
    %808 = vmatpush1.bf16.msra.mxu0 %v614
    %809 = vmatprep.subr.bf16.mxu0 0
    %810 = vmatpush1.bf16.msra.mxu0 %v613
    %811 = vmatprep.subr.bf16.mxu0 0
    %812 = vmatpush1.bf16.msra.mxu0 %v612
    %813 = vmatprep.subr.bf16.mxu0 0
    %814 = vmatpush1.bf16.msra.mxu0 %v611
    %815 = vmatprep.subr.bf16.mxu0 0
    %816 = vmatpush1.bf16.msra.mxu0 %v610
    %817 = vmatprep.subr.bf16.mxu0 0
    %818 = vmatpush1.bf16.msra.mxu0 %v609
    %819 = vmatprep.subr.bf16.mxu0 0
    %820 = vmatpush1.bf16.msra.mxu0 %v608
    %821 = vmatprep.subr.bf16.mxu0 0
    %822 = vmatpush1.bf16.msra.mxu0 %v607
    %823 = vmatprep.subr.bf16.mxu0 0
    %824 = vmatpush2.bf16.msra.mxu0 %v622
    %825 = vmatprep.subr.bf16.mxu0 0
    %826 = vmatpush2.bf16.msra.mxu0 %v621
    %827 = vmatprep.subr.bf16.mxu0 0
    %828 = vmatpush2.bf16.msra.mxu0 %v620
    %829 = vmatprep.subr.bf16.mxu0 0
    %830 = vmatpush2.bf16.msra.mxu0 %v619
    %831 = vmatprep.subr.bf16.mxu0 0
    %832 = vmatpush2.bf16.msra.mxu0 %v618
    %833 = vmatprep.subr.bf16.mxu0 0
    %834 = vmatpush2.bf16.msra.mxu0 %v617
    %835 = vmatprep.subr.bf16.mxu0 0
    %836 = vmatpush2.bf16.msra.mxu0 %v616
    %837 = vmatprep.subr.bf16.mxu0 0
    %838 = vmatpush2.bf16.msra.mxu0 %v615
    %839 = vmatprep.mubr.bf16.mxu0 %v96
    %840 = vmatmul.mubr.bf16.gmra.mxu0 %v95
    %v841 = vpop.f32.mrf.mxu0
    %v842 = vadd.f32 %v802, %v841
    %v843 = vpop.f32.mrf.mxu0
    %v844 = vpop.f32.mrf.mxu0
    %v845 = vpop.f32.mrf.mxu0
    %846 = vdwg.mxu0
    %v847 = vld [vmem:[%s4] sm:$0x1]
    %v849 = vlaneseq
    %v850 = vshrl.u32 %v849, 7
    %v851 = vsub.s32 0, %v850
    %v852 = vrot.slane %v847, %v851
    %v854 = vadd.f32 %v842, %v852
    %v855 = vmax.f32 %v854, 0.0
    %v856 = vld [vmem:[%s5] sm:$0xff]
    %v857 = vld [vmem:[%s5 + $0x8] sm:$0xff]
    %v858 = vld [vmem:[%s5 + $0x10] sm:$0xff]
    %v859 = vld [vmem:[%s5 + $0x18] sm:$0xff]
    %v860 = vld [vmem:[%s5 + $0x20] sm:$0xff]
    %v861 = vld [vmem:[%s5 + $0x28] sm:$0xff]
    %v862 = vld [vmem:[%s5 + $0x30] sm:$0xff]
    %v863 = vld [vmem:[%s5 + $0x38] sm:$0xff]
    %v864 = vld [vmem:[%s5 + $0x40] sm:$0xff]
    %v865 = vld [vmem:[%s5 + $0x48] sm:$0xff]
    %v866 = vld [vmem:[%s5 + $0x50] sm:$0xff]
    %v867 = vld [vmem:[%s5 + $0x58] sm:$0xff]
    %v868 = vld [vmem:[%s5 + $0x60] sm:$0xff]
    %v869 = vld [vmem:[%s5 + $0x68] sm:$0xff]
    %v870 = vld [vmem:[%s5 + $0x70] sm:$0xff]
    %v871 = vld [vmem:[%s5 + $0x78] sm:$0xff]
    %v872 = vld [vmem:[#allocation2] sm:$0x1]
    %v874 = vlaneseq
    %v875 = vshrl.u32 %v874, 7
    %v876 = vsub.s32 0, %v875
    %v877 = vrot.slane %v872, %v876
    %879 = vmatprep.subr.mxu0 0.0
    %880 = vmatpush1.msra.mxu0 %v871
    %881 = vmatprep.subr.mxu0 0.0
    %882 = vmatpush1.msra.mxu0 %v870
    %883 = vmatprep.subr.mxu0 0.0
    %884 = vmatpush1.msra.mxu0 %v869
    %885 = vmatprep.subr.mxu0 0.0
    %886 = vmatpush1.msra.mxu0 %v868
    %887 = vmatprep.subr.mxu0 0.0
    %888 = vmatpush1.msra.mxu0 %v867
    %889 = vmatprep.subr.mxu0 0.0
    %890 = vmatpush1.msra.mxu0 %v866
    %891 = vmatprep.subr.mxu0 0.0
    %892 = vmatpush1.msra.mxu0 %v865
    %893 = vmatprep.subr.mxu0 0.0
    %894 = vmatpush1.msra.mxu0 %v864
    %895 = vmatprep.subr.mxu0 0.0
    %896 = vmatpush1.msra.mxu0 %v863
    %897 = vmatprep.subr.mxu0 0.0
    %898 = vmatpush1.msra.mxu0 %v862
    %899 = vmatprep.subr.mxu0 0.0
    %900 = vmatpush1.msra.mxu0 %v861
    %901 = vmatprep.subr.mxu0 0.0
    %902 = vmatpush1.msra.mxu0 %v860
    %903 = vmatprep.subr.mxu0 0.0
    %904 = vmatpush1.msra.mxu0 %v859
    %905 = vmatprep.subr.mxu0 0.0
    %906 = vmatpush1.msra.mxu0 %v858
    %907 = vmatprep.subr.mxu0 0.0
    %908 = vmatpush1.msra.mxu0 %v857
    %909 = vmatprep.subr.mxu0 0.0
    %910 = vmatpush1.msra.mxu0 %v856
    %911 = vmatprep.subr.mxu0 0.0
    %912 = vmatpush2.msra.mxu0 0.0
    %913 = vmatprep.subr.mxu0 0.0
    %914 = vmatpush2.msra.mxu0 0.0
    %915 = vmatprep.subr.mxu0 0.0
    %916 = vmatpush2.msra.mxu0 0.0
    %917 = vmatprep.subr.mxu0 0.0
    %918 = vmatpush2.msra.mxu0 0.0
    %919 = vmatprep.subr.mxu0 0.0
    %920 = vmatpush2.msra.mxu0 0.0
    %921 = vmatprep.subr.mxu0 0.0
    %922 = vmatpush2.msra.mxu0 0.0
    %923 = vmatprep.subr.mxu0 0.0
    %924 = vmatpush2.msra.mxu0 0.0
    %925 = vmatprep.subr.mxu0 0.0
    %926 = vmatpush2.msra.mxu0 0.0
    %927 = vmatprep.subr.mxu0 0.0
    %928 = vmatpush2.msra.mxu0 0.0
    %929 = vmatprep.subr.mxu0 0.0
    %930 = vmatpush2.msra.mxu0 0.0
    %931 = vmatprep.subr.mxu0 0.0
    %932 = vmatpush2.msra.mxu0 0.0
    %933 = vmatprep.subr.mxu0 0.0
    %934 = vmatpush2.msra.mxu0 0.0
    %935 = vmatprep.subr.mxu0 0.0
    %936 = vmatpush2.msra.mxu0 0.0
    %937 = vmatprep.subr.mxu0 0.0
    %938 = vmatpush2.msra.mxu0 0.0
    %939 = vmatprep.subr.mxu0 0.0
    %940 = vmatpush2.msra.mxu0 0.0
    %941 = vmatprep.subr.mxu0 0.0
    %942 = vmatpush2.msra.mxu0 0.0
    %943 = vmatprep.mubr.f32.mxu0 0.0
    %944 = vmatmul.mubr.f32.gmra.mxu0 %v855
    %v945 = vpop.f32.mrf.mxu0
    %v946 = vadd.f32 %v877, %v945
    %v947 = vpop.f32.mrf.mxu0
    %948 = vdwg.mxu0
    %vm949 = vcmask 1024
    %950 = vst.msk [vmem:[%s7] sm:$0x3] %vm949, %v946
    // Predicated region
    $region34: #{tpu_custom_call.1} parent=1 // pred_check
      _
    $region35: #{tpu_custom_call.1} parent=1 // pred_check_branch
      %952 = sbr.rel (0) target = $region37
    $region36: #{tpu_custom_call.1} parent=1 // pred_region
      _
    $region37: #{tpu_custom_call.1} parent=1 // pred_fallthru
      _
    // Predicated region
    $region38: #{tpu_custom_call.1} parent=1 // pred_check
      _
    $region39: #{tpu_custom_call.1} parent=1 // pred_check_branch
      %954 = sbr.rel (0) target = $region41
    $region40: #{tpu_custom_call.1} parent=1 // pred_region
      _
    $region41: #{tpu_custom_call.1} parent=1 // pred_fallthru
      _
    %955 = vsyncpa [#allocation4], 1

</llo_original>
